<compile_context>
chip_gen: v7x
topology: tpu7x:2x2x1
jax: 0.10.0
libtpu: 0.0.40
codegen_flags: <defaults>
</compile_context>

<pallas_src>
import jax
import jax.numpy as jnp
from jax.experimental import pallas as pl
from jax.experimental.pallas import tpu as pltpu


def _sat_kernel(factor_ref, x_ref, o_ref):
    # factor_ref: SMEM (1,) f32 -- random saturation factor
    # x_ref / o_ref: VMEM (1, 3, TR, L)
    f = factor_ref[0]
    x = x_ref[...].astype(jnp.float32)          # (1, 3, TR, L)

    # [-1, 1] -> [0, 1]
    x01 = (x + 1.0) * 0.5

    # luma grayscale (torchvision coefficients)
    gray = (0.2989 * x01[:, 0] + 0.587 * x01[:, 1] + 0.114 * x01[:, 2])
    gray = gray[:, None, :, :]                  # (1, 1, TR, L)

    # fused blend + clamp + rescale:
    #   2*clip(gray + f*(x01-gray), 0, 1) - 1 == clip(2*(gray + f*(x01-gray)) - 1, -1, 1)
    blended = gray + f * (x01 - gray)
    out = jnp.clip(2.0 * blended - 1.0, -1.0, 1.0)
    o_ref[...] = out.astype(o_ref.dtype)


def _choose_row_tile(R, L, itemsize, C=3, target_block_bytes=4 << 20):
    """Rows per block so one (1, 3, TR, L) block is ~<=4 MiB; TR % 16 == 0 or TR == R."""
    rows = target_block_bytes // (C * L * itemsize)
    rows = max(16, (rows // 16) * 16)
    if rows >= R:
        return R
    return rows


def sat_forward(noised, factor):
    """noised: (N, 3, H, W) float; factor: scalar float32 saturation factor."""
    N, C, H, W = noised.shape
    assert C == 3, "saturation jitter requires RGB (C == 3)"
    dtype = noised.dtype
    factor_arr = jnp.reshape(jnp.asarray(factor, jnp.float32), (1,))

    # Pick a lane-dense view of the spatial dims.
    if W % 128 == 0:
        R, L = H, W
        x4 = noised
        reshaped = False
    elif (H * W) % 128 == 0:
        R, L = (H * W) // 128, 128
        x4 = noised.reshape(N, C, R, L)
        reshaped = True
    else:
        # Fallback: keep natural layout (lanes partially padded).
        R, L = H, W
        x4 = noised
        reshaped = False

    TR = _choose_row_tile(R, L, jnp.dtype(dtype).itemsize)
    grid = (N, pl.cdiv(R, TR))

    out = pl.pallas_call(
        _sat_kernel,
        out_shape=jax.ShapeDtypeStruct((N, C, R, L), dtype),
        grid_spec=pl.GridSpec(
            grid=grid,
            in_specs=[
                pl.BlockSpec(memory_space=pltpu.MemorySpace.SMEM),       # factor
                pl.BlockSpec((1, C, TR, L), lambda n, r: (n, 0, r, 0)),  # image
            ],
            out_specs=pl.BlockSpec((1, C, TR, L), lambda n, r: (n, 0, r, 0)),
        ),
        compiler_params=pltpu.CompilerParams(
            dimension_semantics=("parallel", "parallel")),
        input_output_aliases={1: 0},   # overwrite the (copy of the) image in place
    )(factor_arr, x4)

    return out.reshape(N, C, H, W) if reshaped else out


class SatPallas:
    """JAX/Pallas port of noise_layers/sat.py::Sat."""

    def __init__(self, ratio=15.0):
        self.ratio = float(ratio)
        # ColorJitter(saturation=ratio) -> factor ~ U(max(0, 1-ratio), 1+ratio)
        self.lo = max(0.0, 1.0 - self.ratio)
        self.hi = 1.0 + self.ratio

    def __call__(self, noised_and_cover, key):
        factor = jax.random.uniform(
            key, (), dtype=jnp.float32, minval=self.lo, maxval=self.hi)
        noised_and_cover = list(noised_and_cover)
        noised_and_cover[0] = sat_forward(noised_and_cover[0], factor)
        return noised_and_cover


def _reference(noised, factor):
    """Pure-JAX reference in the original torchvision form."""
    x01 = (noised + 1.0) / 2.0
    gray = 0.2989 * x01[:, 0] + 0.587 * x01[:, 1] + 0.114 * x01[:, 2]
    gray = gray[:, None, :, :]
    blended = jnp.clip(factor * x01 + (1.0 - factor) * gray, 0.0, 1.0)
    return 2.0 * blended - 1.0


if __name__ == "__main__":
    key = jax.random.PRNGKey(0)
    k_img, k_cover, k_factor = jax.random.split(key, 3)

    sat = SatPallas(ratio=15.0)
    factor = jax.random.uniform(k_factor, (), dtype=jnp.float32,
                                minval=sat.lo, maxval=sat.hi)

    # exercise both layout paths: W not a multiple of 128, and W == 128
    for (N, C, H, W) in [(2, 3, 16, 16), (2, 3, 24, 128)]:
        noised = jax.random.uniform(k_img, (N, C, H, W), dtype=jnp.float32,
                                    minval=-1.0, maxval=1.0)
        cover = jax.random.uniform(k_cover, (N, C, H, W), dtype=jnp.float32,
                                   minval=-1.0, maxval=1.0)

        out = sat([noised, cover], k_factor)
        out0 = jax.block_until_ready(out[0])

        ref = _reference(noised, factor)
        assert out0.shape == (N, C, H, W)
        assert jnp.allclose(out0, ref, atol=2e-5, rtol=1e-5), (
            float(jnp.max(jnp.abs(out0 - ref))))
        # cover image passes through untouched
        assert jnp.array_equal(out[1], cover)

    print("KERNEL_OK")
</pallas_src>

<mosaic_0001>
module attributes {stable_mosaic.version = 11 : i64} {
  func.func @_sat_kernel(%arg0: i32, %arg1: i32, %arg2: memref<1xf32, #tpu.memory_space<smem>>, %arg3: memref<1x3x2x128xf32, #tpu.memory_space<vmem>>, %arg4: memref<1x3x2x128xf32, #tpu.memory_space<vmem>>) attributes {dimension_semantics = [#tpu.dimension_semantics<parallel>, #tpu.dimension_semantics<parallel>], iteration_bounds = array<i64: 2, 1>, scalar_prefetch = 0 : i64, scratch_operands = 0 : i64, tpu.core_type = #tpu.core_type<tc>, window_params = [{transform_indices = @transform_0, window_bounds = array<i64: 1>}, {transform_indices = @transform_1, window_bounds = array<i64: 1, 3, 2, 128>}, {transform_indices = @transform_2, window_bounds = array<i64: 1, 3, 2, 128>}]} {
    %c0 = arith.constant 0 : index
    %0 = memref.load %arg2[%c0] : memref<1xf32, #tpu.memory_space<smem>>
    %c0_0 = arith.constant 0 : index
    %c0_1 = arith.constant 0 : index
    %c0_2 = arith.constant 0 : index
    %c0_3 = arith.constant 0 : index
    %1 = vector.load %arg3[%c0_0, %c0_1, %c0_2, %c0_3] : memref<1x3x2x128xf32, #tpu.memory_space<vmem>>, vector<1x3x2x128xf32>
    %cst = arith.constant 1.000000e+00 : f32
    %2 = vector.broadcast %cst : f32 to vector<1x3x2x128xf32>
    %3 = arith.addf %1, %2 : vector<1x3x2x128xf32>
    %cst_4 = arith.constant 5.000000e-01 : f32
    %4 = vector.broadcast %cst_4 : f32 to vector<1x3x2x128xf32>
    %5 = arith.mulf %3, %4 : vector<1x3x2x128xf32>
    %6 = vector.extract_strided_slice %5 {offsets = [0, 0, 0, 0], sizes = [1, 1, 2, 128], strides = [1, 1, 1, 1]} : vector<1x3x2x128xf32> to vector<1x1x2x128xf32>
    %7 = vector.shape_cast %6 : vector<1x1x2x128xf32> to vector<1x2x128xf32>
    %cst_5 = arith.constant 2.989000e-01 : f32
    %8 = vector.broadcast %cst_5 : f32 to vector<1x2x128xf32>
    %9 = arith.mulf %8, %7 : vector<1x2x128xf32>
    %10 = vector.extract_strided_slice %5 {offsets = [0, 1, 0, 0], sizes = [1, 1, 2, 128], strides = [1, 1, 1, 1]} : vector<1x3x2x128xf32> to vector<1x1x2x128xf32>
    %11 = vector.shape_cast %10 : vector<1x1x2x128xf32> to vector<1x2x128xf32>
    %cst_6 = arith.constant 5.870000e-01 : f32
    %12 = vector.broadcast %cst_6 : f32 to vector<1x2x128xf32>
    %13 = arith.mulf %12, %11 : vector<1x2x128xf32>
    %14 = arith.addf %9, %13 : vector<1x2x128xf32>
    %15 = vector.extract_strided_slice %5 {offsets = [0, 2, 0, 0], sizes = [1, 1, 2, 128], strides = [1, 1, 1, 1]} : vector<1x3x2x128xf32> to vector<1x1x2x128xf32>
    %16 = vector.shape_cast %15 : vector<1x1x2x128xf32> to vector<1x2x128xf32>
    %cst_7 = arith.constant 1.140000e-01 : f32
    %17 = vector.broadcast %cst_7 : f32 to vector<1x2x128xf32>
    %18 = arith.mulf %17, %16 : vector<1x2x128xf32>
    %19 = arith.addf %14, %18 : vector<1x2x128xf32>
    %20 = vector.shape_cast %19 : vector<1x2x128xf32> to vector<1x1x2x128xf32>
    %21 = vector.broadcast %20 : vector<1x1x2x128xf32> to vector<1x3x2x128xf32>
    %22 = arith.subf %5, %21 : vector<1x3x2x128xf32>
    %23 = vector.broadcast %0 : f32 to vector<1x3x2x128xf32>
    %24 = arith.mulf %23, %22 : vector<1x3x2x128xf32>
    %25 = vector.broadcast %20 : vector<1x1x2x128xf32> to vector<1x3x2x128xf32>
    %26 = arith.addf %25, %24 : vector<1x3x2x128xf32>
    %cst_8 = arith.constant 2.000000e+00 : f32
    %27 = vector.broadcast %cst_8 : f32 to vector<1x3x2x128xf32>
    %28 = arith.mulf %27, %26 : vector<1x3x2x128xf32>
    %cst_9 = arith.constant 1.000000e+00 : f32
    %29 = vector.broadcast %cst_9 : f32 to vector<1x3x2x128xf32>
    %30 = arith.subf %28, %29 : vector<1x3x2x128xf32>
    %cst_10 = arith.constant -1.000000e+00 : f32
    %cst_11 = arith.constant 1.000000e+00 : f32
    %31 = vector.broadcast %cst_10 : f32 to vector<1x3x2x128xf32>
    %32 = arith.maximumf %31, %30 : vector<1x3x2x128xf32>
    %33 = vector.broadcast %cst_11 : f32 to vector<1x3x2x128xf32>
    %34 = arith.minimumf %33, %32 : vector<1x3x2x128xf32>
    %c0_12 = arith.constant 0 : index
    %c0_13 = arith.constant 0 : index
    %c0_14 = arith.constant 0 : index
    %c0_15 = arith.constant 0 : index
    %35 = vector.load %arg4[%c0_12, %c0_13, %c0_14, %c0_15] : memref<1x3x2x128xf32, #tpu.memory_space<vmem>>, vector<1x3x2x128xf32>
    tpu.vector_store %arg4[%c0_12, %c0_13, %c0_14, %c0_15], %34 {strides = array<i32>} : memref<1x3x2x128xf32, #tpu.memory_space<vmem>>, vector<1x3x2x128xf32>,
    return
  }
  func.func @transform_0(%arg0: i32, %arg1: i32) -> i32 {
    %c0_i32 = arith.constant 0 : i32
    %c0_i32_0 = arith.constant 0 : i32
    return %c0_i32 : i32
  }
  func.func @transform_1(%arg0: i32, %arg1: i32) -> (i32, i32, i32, i32) {
    %c0_i32 = arith.constant 0 : i32
    %c0_i32_0 = arith.constant 0 : i32
    %c0_i32_1 = arith.constant 0 : i32
    return %arg0, %c0_i32, %arg1, %c0_i32_0 : i32, i32, i32, i32
  }
  func.func @transform_2(%arg0: i32, %arg1: i32) -> (i32, i32, i32, i32) {
    %c0_i32 = arith.constant 0 : i32
    %c0_i32_0 = arith.constant 0 : i32
    %c0_i32_1 = arith.constant 0 : i32
    return %arg0, %c0_i32, %arg1, %c0_i32_0 : i32, i32, i32, i32
  }
}

</mosaic_0001>

<llo_original>
// kernel: tpu_custom_call.1
$region0: #{tpu_custom_call.1}
  #allocation0 [shape = 'u32[]', space=smem, size = 0x4, offset = 0x4, fixed_abs, tag = 'smem constant byte address 0x4 - core index']
  #allocation1 [shape = 'u32[144,128]{1,0:T(1,128)}', space=vmem, size = 0x12000, scoped, tag = 'internal scratch']
  #allocation2 [shape = 'f32[1]{0:T(128)S(6)}', space=smem, size = 0x200, scoped, tag = 'scoped memory for tpu_custom_call.1']
  %s0 = inlined_call_operand.<no memory space> [shape: f32[1], index: 0, kind: input, shape index: {}]
  %s1 = inlined_call_operand.hbm [shape: f32[2,3,2,128], index: 1, kind: input, shape index: {}, may-alias: {1,2}]
  %s2 = inlined_call_operand.hbm [shape: f32[2,3,2,128], index: 2, kind: output, shape index: {}, may-alias: {1,2}]
  %s3 = sld [smem:[#allocation0]]
  $region45: #{tpu_custom_call.1} parent=0
    _
  %s5 = ssub.s32 1, %s3
  %s6 = scalar_select 0, %s5, %s3
  %7 = sst [smem:[#allocation2]] %s0
  $region1: #{tpu_custom_call.1} parent=0
    #allocation3 [shape = 'u8[6144]{0}', space=vmem, size = 0x1800, scoped, tag = 'input window, operand 1']
    #allocation4 [shape = 's32[2]{0}', space=sflag, size = 0x8, scoped, tag = 'scoped memory for tpu_custom_call.1']
    #allocation5 [shape = 's32[2]{0}', space=sflag, size = 0x8, scoped, tag = 'scoped memory for tpu_custom_call.1']
    #allocation6 [shape = 'u8[6144]{0}', space=vmem, size = 0x1800, scoped, tag = 'output window, operand 0']
    %8 = vsyncpa [#allocation4], 0
    %s9 = scalar_lea.sflag [#allocation4], 1
    %10 = vsyncpa %s9, 0
    %11 = vsyncpa [#allocation5], 0
    %s12 = scalar_lea.sflag [#allocation5], 1
    %13 = vsyncpa %s12, 0
    loop: start=0, step=1, limit=4
    $region2: #{tpu_custom_call.1} parent=1 // loop_pre_header
      _
    $region3: #{tpu_custom_call.1} parent=1 // loop_header
      %s15 = sphi 0, %s19
      %p16 = scmp.ge.s32.totalorder %s15, 4
      %s22 = sphi 0, %s34
      %s23 = sphi 0, %s30
      %s24 = sphi 0, %s22
      %s25 = sphi 0, %s23
      %s26 = sphi 0, %s24
      %s27 = sphi 0, %s25
      %s35 = sphi 0, %s35
      %s37 = sphi 0, %s35
      %s38 = sphi 0, %s37
      %s52 = sphi 0, %s38
      %s60 = sphi 0, %s62
      %s63 = sphi 0, %s60
      %s64 = sphi 0, %s63
      %s80 = sphi 0, %s64
      %s88 = sphi 0, %s90
      %s91 = sphi 0, %s88
      %s92 = sphi 0, %s91
      %s108 = sphi 0, %s92
    $region4: #{tpu_custom_call.1} parent=1 // loop_header_branch
      %18 = sbr.rel (%p16) target = $region8
    $region5: #{tpu_custom_call.1} parent=1 // loop_body
      %s20 = ssub.s32 %s15, 1
      %s21 = ssub.s32 %s15, 2
      %s28 = sadd.s32 1, %s23
      %p29 = scmp.ge.s32.totalorder %s28, 1
      %s30 = scalar_select %p29, 0, %s28
      %s31 = sadd.s32 1, %s22
      %s32 = scalar_select %p29, %s31, %s22
      %p33 = scmp.ge.s32.totalorder %s32, 2
      %s34 = scalar_select %p33, 0, %s32
      %s36 = sadd.s32 %s35, 1
      %p39 = scmp.eq.s32.totalorder %s15, 1
      %p40 = scmp.ne.s32.totalorder %s35, %s37
      %p41 = scmp.eq.s32.totalorder %s15, 0
      %p42 = por %p40, %p41
      %p43 = scmp.ne.s32.totalorder %s35, %s37
      %p44 = scmp.eq.s32.totalorder %s20, 1
      %p45 = por %p43, %p44
      %p46 = scmp.ne.s32.totalorder %s37, %s38
      %p47 = scmp.eq.s32.totalorder %s20, 0
      %p48 = por %p46, %p47
      %p49 = scmp.ne.s32.totalorder %s37, %s38
      %p50 = scmp.eq.s32.totalorder %s21, 1
      %p51 = por %p49, %p50
      %p53 = scmp.ne.s32.totalorder %s38, %s52
      %p54 = scmp.eq.s32.totalorder %s21, 0
      %p55 = por %p53, %p54
      %s56 = ssub.s32 %s22, %s34
      %s57 = ssub.s32 %s23, %s30
      %s58 = sor.u32 %s56, %s57
      %p59 = scmp.eq.s32.totalorder %s58, 0
      %s61 = sadd.s32 %s60, 1
      %s62 = scalar_select %p59, %s60, %s61
      %p65 = pneg %p59
      %p66 = scmp.eq.s32.totalorder %s15, 1
      %p67 = por %p65, %p66
      %p68 = scmp.ne.s32.totalorder %s60, %s63
      %p69 = scmp.eq.s32.totalorder %s15, 0
      %p70 = por %p68, %p69
      %p71 = scmp.ne.s32.totalorder %s60, %s63
      %p72 = scmp.eq.s32.totalorder %s20, 1
      %p73 = por %p71, %p72
      %p74 = scmp.ne.s32.totalorder %s63, %s64
      %p75 = scmp.eq.s32.totalorder %s20, 0
      %p76 = por %p74, %p75
      %p77 = scmp.ne.s32.totalorder %s63, %s64
      %p78 = scmp.eq.s32.totalorder %s21, 1
      %p79 = por %p77, %p78
      %p81 = scmp.ne.s32.totalorder %s64, %s80
      %p82 = scmp.eq.s32.totalorder %s21, 0
      %p83 = por %p81, %p82
      %s84 = ssub.s32 %s22, %s34
      %s85 = ssub.s32 %s23, %s30
      %s86 = sor.u32 %s84, %s85
      %p87 = scmp.eq.s32.totalorder %s86, 0
      %s89 = sadd.s32 %s88, 1
      %s90 = scalar_select %p87, %s88, %s89
      %p93 = pneg %p87
      %p94 = scmp.eq.s32.totalorder %s15, 1
      %p95 = por %p93, %p94
      %p96 = scmp.ne.s32.totalorder %s88, %s91
      %p97 = scmp.eq.s32.totalorder %s15, 0
      %p98 = por %p96, %p97
      %p99 = scmp.ne.s32.totalorder %s88, %s91
      %p100 = scmp.eq.s32.totalorder %s20, 1
      %p101 = por %p99, %p100
      %p102 = scmp.ne.s32.totalorder %s91, %s92
      %p103 = scmp.eq.s32.totalorder %s20, 0
      %p104 = por %p102, %p103
      %p105 = scmp.ne.s32.totalorder %s91, %s92
      %p106 = scmp.eq.s32.totalorder %s21, 1
      %p107 = por %p105, %p106
      %p109 = scmp.ne.s32.totalorder %s92, %s108
      %p110 = scmp.eq.s32.totalorder %s21, 0
      %p111 = por %p109, %p110
      %p112 = scmp.le.s32.totalorder 1, %s15
      %p113 = scmp.lt.s32.totalorder %s15, 3
      %p114 = pnand %p112, %p113
      %p115 = pneg %p114
      // Predicated region
      $region9: #{tpu_custom_call.1} parent=5 // pred_check
        _
      $region10: #{tpu_custom_call.1} parent=5 // pred_check_branch
        %117 = sbr.rel (%p114) target = $region12
      $region11: #{tpu_custom_call.1} parent=5 // pred_region
        %s118 = ssub.s32 %s15, 1
        // Predicated region
        $region13: #{tpu_custom_call.1} parent=11 // pred_check
          %p119 = pneg %p48
        $region14: #{tpu_custom_call.1} parent=11 // pred_check_branch
          %121 = sbr.rel (%p119) target = $region16
        $region15: #{tpu_custom_call.1} parent=11 // pred_region
          _
        $region16: #{tpu_custom_call.1} parent=11 // pred_fallthru
          _
      $region12: #{tpu_custom_call.1} parent=5 // pred_fallthru
        _
      %p122 = scmp.lt.s32.totalorder %s15, 2
      // Predicated region
      $region17: #{tpu_custom_call.1} parent=5 // pred_check
        %p123 = pneg %p122
      $region18: #{tpu_custom_call.1} parent=5 // pred_check_branch
        %125 = sbr.rel (%p123) target = $region20
      $region19: #{tpu_custom_call.1} parent=5 // pred_region
        // Predicated region
        $region21: #{tpu_custom_call.1} parent=19 // pred_check
          %p126 = pneg %p70
        $region22: #{tpu_custom_call.1} parent=19 // pred_check_branch
          %128 = sbr.rel (%p126) target = $region24
        $region23: #{tpu_custom_call.1} parent=19 // pred_region
          %s129 = sand.u32 %s60, 1
          %s130 = scalar_lea.sflag [#allocation4], %s129
          %s131 = sand.u32 %s60, 1
          %s132 = smul.addr %s131, 6
          %s133 = scalar_lea.vmem [#allocation3], %s132
          %s135 = ssub.s32 96, 96
          %136 = vsyncadd %s130, %s135
          %s137 = smul.addr %s22, 3
          %s138 = sadd.s32 %s23, %s137
          %s139 = smul.addr %s138, 32
          %s140 = scalar_lea.hbm %s1, %s139
          %s141 = sshll.u32 %s133, 4
          %s142 = int_to_ptr.vmem [resolvable:$true] %s141
          %147 = dma.hbm_to_vmem [thread:$0]  %s140, 96, %s142, %s130, 32, 32, 2
        $region24: #{tpu_custom_call.1} parent=19 // pred_fallthru
          _
      $region20: #{tpu_custom_call.1} parent=5 // pred_fallthru
        _
      %p148 = scmp.le.s32.totalorder 1, %s15
      %p149 = scmp.lt.s32.totalorder %s15, 3
      %p150 = pnand %p148, %p149
      %p151 = pneg %p150
      // Predicated region
      $region25: #{tpu_custom_call.1} parent=5 // pred_check
        _
      $region26: #{tpu_custom_call.1} parent=5 // pred_check_branch
        %153 = sbr.rel (%p150) target = $region28
      $region27: #{tpu_custom_call.1} parent=5 // pred_region
        %s154 = ssub.s32 %s15, 1
        %s155 = sand.u32 %s63, 1
        %s156 = scalar_lea.sflag [#allocation4], %s155
        %s157 = sand.u32 %s63, 1
        %s158 = smul.addr %s157, 6
        %s159 = scalar_lea.vmem [#allocation3], %s158
        // Predicated region
        $region29: #{tpu_custom_call.1} parent=27 // pred_check
          %p160 = pneg %p76
        $region30: #{tpu_custom_call.1} parent=27 // pred_check_branch
          %162 = sbr.rel (%p160) target = $region32
        $region31: #{tpu_custom_call.1} parent=27 // pred_region
          %163 = dma.done %s156, 96
        $region32: #{tpu_custom_call.1} parent=27 // pred_fallthru
          _
        %p164 = pneg %p48
        %p165 = pneg %p45
        %s166 = sand.u32 %s63, 1
        %s167 = scalar_lea.sflag [#allocation4], %s166
        %s168 = sand.u32 %s63, 1
        %s169 = smul.addr %s168, 6
        %s170 = scalar_lea.vmem [#allocation3], %s169
        %p171 = pneg %p76
        %p172 = pneg %p73
        %p173 = pneg %p104
        %p174 = pneg %p101
        %s175 = sand.u32 %s91, 1
        %s176 = scalar_lea.sflag [#allocation5], %s175
        %s177 = sand.u32 %s91, 1
        %s178 = smul.addr %s177, 6
        %s179 = scalar_lea.vmem [#allocation6], %s178
        %s180 = sld [smem:[#allocation2]]
        %v181 = vld [vmem:[%s159] sm:$0x3]
        %v182 = vld [vmem:[%s159 + $0x2] sm:$0x3]
        %v183 = vld [vmem:[%s159 + $0x4] sm:$0x3]
        %v184 = vadd.f32 %v181, 1.0
        %v185 = vadd.f32 %v182, 1.0
        %v186 = vadd.f32 %v183, 1.0
        %v187 = vmul.f32 %v184, 0.5
        %v188 = vmul.f32 %v185, 0.5
        %v189 = vmul.f32 %v186, 0.5
        %v190 = vmul.f32 %v187, 0.2989
        %v191 = vmul.f32 %v188, 0.587
        %v192 = vadd.f32 %v190, %v191
        %v193 = vmul.f32 %v189, 0.114
        %v194 = vadd.f32 %v192, %v193
        %v195 = vsub.f32 %v187, %v194
        %v196 = vsub.f32 %v188, %v194
        %v197 = vsub.f32 %v189, %v194
        %v198 = vstv %s180
        %v199 = vmul.f32 %v198, %v195
        %v200 = vmul.f32 %v198, %v196
        %v201 = vmul.f32 %v198, %v197
        %v202 = vadd.f32 %v194, %v199
        %v203 = vadd.f32 %v194, %v200
        %v204 = vadd.f32 %v194, %v201
        %v205 = vmul.f32 %v202, 2.0
        %v206 = vmul.f32 %v203, 2.0
        %v207 = vmul.f32 %v204, 2.0
        %v208 = vsub.f32 %v205, 1.0
        %v209 = vsub.f32 %v206, 1.0
        %v210 = vsub.f32 %v207, 1.0
        %v211 = vmax.f32 %v208, -1.0
        %v212 = vmax.f32 %v209, -1.0
        %v213 = vmax.f32 %v210, -1.0
        %v214 = vmin.f32 %v211, 1.0
        %v215 = vmin.f32 %v212, 1.0
        %v216 = vmin.f32 %v213, 1.0
        %217 = vst [vmem:[%s179] sm:$0x3] %v214
        %218 = vst [vmem:[%s179 + $0x2] sm:$0x3] %v215
        %219 = vst [vmem:[%s179 + $0x4] sm:$0x3] %v216
        %s220 = sand.u32 %s91, 1
        %s221 = scalar_lea.sflag [#allocation5], %s220
        %s222 = sand.u32 %s91, 1
        %s223 = smul.addr %s222, 6
        %s224 = scalar_lea.vmem [#allocation6], %s223
        // Predicated region
        $region33: #{tpu_custom_call.1} parent=27 // pred_check
          %p225 = pneg %p101
        $region34: #{tpu_custom_call.1} parent=27 // pred_check_branch
          %227 = sbr.rel (%p225) target = $region36
        $region35: #{tpu_custom_call.1} parent=27 // pred_region
          %s229 = ssub.s32 96, 96
          %230 = vsyncadd %s221, %s229
          %s231 = smul.addr %s24, 3
          %s232 = sadd.s32 %s25, %s231
          %s233 = smul.addr %s232, 32
          %s234 = scalar_lea.hbm %s2, %s233
          %s235 = sshll.u32 %s224, 4
          %s236 = int_to_ptr.vmem [resolvable:$true] %s235
          %241 = dma.vmem_to_hbm [thread:$0]  %s236, 96, %s234, %s221, 32, 32, 2
        $region36: #{tpu_custom_call.1} parent=27 // pred_fallthru
          _
      $region28: #{tpu_custom_call.1} parent=5 // pred_fallthru
        _
      %p242 = scmp.le.s32.totalorder 2, %s15
      // Predicated region
      $region37: #{tpu_custom_call.1} parent=5 // pred_check
        %p243 = pneg %p242
      $region38: #{tpu_custom_call.1} parent=5 // pred_check_branch
        %245 = sbr.rel (%p243) target = $region40
      $region39: #{tpu_custom_call.1} parent=5 // pred_region
        %s246 = ssub.s32 %s15, 2
        // Predicated region
        $region41: #{tpu_custom_call.1} parent=39 // pred_check
          %p247 = pneg %p107
        $region42: #{tpu_custom_call.1} parent=39 // pred_check_branch
          %249 = sbr.rel (%p247) target = $region44
        $region43: #{tpu_custom_call.1} parent=39 // pred_region
          %s250 = sand.u32 %s92, 1
          %s251 = scalar_lea.sflag [#allocation5], %s250
          %s252 = sand.u32 %s92, 1
          %s253 = smul.addr %s252, 6
          %s254 = scalar_lea.vmem [#allocation6], %s253
          %255 = dma.done %s251, 96
        $region44: #{tpu_custom_call.1} parent=39 // pred_fallthru
          _
      $region40: #{tpu_custom_call.1} parent=5 // pred_fallthru
        _
    $region6: #{tpu_custom_call.1} parent=1 // loop_footer
      %s19 = sadd.s32 1, %s15
    $region7: #{tpu_custom_call.1} parent=1 // loop_footer_branch
      %14 = sbr.rel target = $region3
    $region8: #{tpu_custom_call.1} parent=1 // loop_exit
      _
    %256 = vsyncpa [#allocation4], 1
    %s257 = scalar_lea.sflag [#allocation4], 1
    %258 = vsyncpa %s257, 1
    %259 = vsyncpa [#allocation5], 1
    %s260 = scalar_lea.sflag [#allocation5], 1
    %261 = vsyncpa %s260, 1

</llo_original>
